<compile_context>
chip_gen: v5e
topology: v5e:2x2
jax: 0.10.0
libtpu: 0.0.40
codegen_flags: <defaults>
</compile_context>

<pallas_src>
import jax
import jax.numpy as jnp
from jax.experimental import pallas as pl
from jax.experimental.pallas import tpu as pltpu

_LANES = 128


def _map_transform_kernel(s_ref, b_ref, x_ref, o_ref):
    # s_ref / b_ref: (TR, 1) f32 per-row scale/bias.
    # x_ref / o_ref: (TR, 128) lane-dense pixel tiles.
    x = x_ref[...].astype(jnp.float32)
    o_ref[...] = (x * s_ref[...] + b_ref[...]).astype(o_ref.dtype)


def _round_up(a, b):
    return -(-a // b) * b


def map_transform(x, mean, std, *, out_dtype=jnp.float32, tile_rows_max=4096):
    """Apply ConvertImageDtype(float) + Normalize(mean, std) per NCHW image.

    Args:
        x:    (N, C, H, W) images; uint8 (scaled by 1/255) or float (no scale).
        mean: (C,) per-channel mean (of the [0,1]-scaled values).
        std:  (C,) per-channel std.
        out_dtype: output dtype (float32 default; bfloat16 halves write bytes).
        tile_rows_max: max 128-lane rows per tile (4096 -> 2 MiB f32 tiles;
            raise to 8192 on v7x, keep <=4096 on v5e).

    Returns:
        (N, C, H, W) transformed images (stacked, like torch.stack).
    """
    N, C, H, W = x.shape
    HW = H * W
    in_dtype = jnp.dtype(x.dtype)
    out_dtype = jnp.dtype(out_dtype)

    # Fold dtype conversion + normalize into one scale/bias FMA.
    mean = jnp.asarray(mean, dtype=jnp.float32)
    std = jnp.asarray(std, dtype=jnp.float32)
    if jnp.issubdtype(in_dtype, jnp.floating):
        scale = 1.0 / std                                   # float source: no /255
    else:
        scale = 1.0 / (float(jnp.iinfo(in_dtype).max) * std)
    bias = -mean / std

    # ---- flat lane-dense view: (total_rows, 128) ----
    padded = (HW % _LANES) != 0
    HW_pad = _round_up(HW, _LANES)
    R = HW_pad // _LANES                 # 128-lane rows per channel-image
    total_rows = N * C * R

    if not padded:
        x_rows = x.reshape(total_rows, _LANES)              # zero-copy reshape
    else:
        # TODO(synk): odd spatial sizes take one wrapper-side pad copy; a fully
        # in-kernel tail mask would need per-element channel indexing.
        x_rows = jnp.pad(x.reshape(N * C, HW), ((0, 0), (0, HW_pad - HW)))
        x_rows = x_rows.reshape(total_rows, _LANES)

    # Per-row scale/bias (row order is n-major, then c, then r): pure
    # broadcast+reshape, ~1/64 of the pixel traffic.
    row_scale = jnp.broadcast_to(scale.reshape(1, C, 1), (N, C, R)).reshape(total_rows, 1)
    row_bias = jnp.broadcast_to(bias.reshape(1, C, 1), (N, C, R)).reshape(total_rows, 1)

    # ---- tile size: biggest flat tile within VMEM, dtype-aligned sublanes ----
    sub_of = {1: 32, 2: 16, 4: 8}
    sub = max(sub_of.get(in_dtype.itemsize, 8), sub_of.get(out_dtype.itemsize, 8))
    tr_cap = _round_up(max(tile_rows_max, sub), sub)
    if total_rows <= tr_cap:
        tr = total_rows                  # single block == full array (any size ok)
    else:
        tr = tr_cap                      # ragged last block handled by masking
    num_blocks = pl.cdiv(total_rows, tr)

    tile_bytes = tr * _LANES * (in_dtype.itemsize + out_dtype.itemsize) + tr * 8
    vmem_limit = int(min(max(2 * tile_bytes + (4 << 20), 16 << 20), 32 << 20))

    bytes_accessed = (total_rows * _LANES * (in_dtype.itemsize + out_dtype.itemsize)
                      + 2 * total_rows * 4)

    out_rows = pl.pallas_call(
        _map_transform_kernel,
        out_shape=jax.ShapeDtypeStruct((total_rows, _LANES), out_dtype),
        grid=(num_blocks,),
        in_specs=[
            pl.BlockSpec((tr, 1), lambda i: (i, 0)),        # row_scale
            pl.BlockSpec((tr, 1), lambda i: (i, 0)),        # row_bias
            pl.BlockSpec((tr, _LANES), lambda i: (i, 0)),   # pixels
        ],
        out_specs=pl.BlockSpec((tr, _LANES), lambda i: (i, 0)),
        compiler_params=pltpu.CompilerParams(
            dimension_semantics=("parallel",),
            vmem_limit_bytes=vmem_limit,
        ),
        cost_estimate=pl.CostEstimate(
            flops=2 * total_rows * _LANES,
            transcendentals=0,
            bytes_accessed=bytes_accessed,
        ),
    )(row_scale, row_bias, x_rows)

    if not padded:
        return out_rows.reshape(N, C, H, W)
    out = out_rows.reshape(N * C, HW_pad)[:, :HW]
    return out.reshape(N, C, H, W)


if __name__ == "__main__":
    key = jax.random.PRNGKey(0)
    N, C, H, W = 2, 4, 16, 16

    mean = jnp.asarray([0.485, 0.456, 0.406, 0.5], dtype=jnp.float32)
    std = jnp.asarray([0.229, 0.224, 0.225, 0.25], dtype=jnp.float32)
    mean_b = mean[None, :, None, None]
    std_b = std[None, :, None, None]

    # ---- float input path (ConvertImageDtype is a no-op for floats) ----
    x_f32 = jax.random.uniform(key, (N, C, H, W), dtype=jnp.float32)
    out = jax.block_until_ready(map_transform(x_f32, mean, std))
    ref = (x_f32 - mean_b) / std_b
    assert out.shape == (N, C, H, W)
    assert jnp.allclose(out, ref, atol=1e-5, rtol=1e-5)

    # ---- uint8 input path (ConvertImageDtype scales by 1/255) ----
    x_u8 = jax.random.randint(
        jax.random.PRNGKey(1), (N, C, H, W), 0, 256, dtype=jnp.int32
    ).astype(jnp.uint8)
    out_u8 = jax.block_until_ready(map_transform(x_u8, mean, std))
    ref_u8 = (x_u8.astype(jnp.float32) / 255.0 - mean_b) / std_b
    assert out_u8.shape == (N, C, H, W)
    assert jnp.allclose(out_u8, ref_u8, atol=1e-5, rtol=1e-5)

    # ---- bf16 output fast path (halves write bytes on this HBM-bound op) ----
    out_bf16 = jax.block_until_ready(
        map_transform(x_u8, mean, std, out_dtype=jnp.bfloat16)
    )
    assert out_bf16.dtype == jnp.bfloat16
    assert jnp.allclose(out_bf16.astype(jnp.float32), ref_u8, atol=3e-2, rtol=3e-2)

    print("KERNEL_OK")
</pallas_src>

<mosaic_0001>
module attributes {stable_mosaic.version = 11 : i64} {
  func.func @_map_transform_kernel(%arg0: i32, %arg1: memref<16x1xf32, #tpu.memory_space<vmem>>, %arg2: memref<16x1xf32, #tpu.memory_space<vmem>>, %arg3: memref<16x128xf32, #tpu.memory_space<vmem>>, %arg4: memref<16x128xf32, #tpu.memory_space<vmem>>) attributes {dimension_semantics = [#tpu.dimension_semantics<parallel>], iteration_bounds = array<i64: 1>, scalar_prefetch = 0 : i64, scratch_operands = 0 : i64, tpu.core_type = #tpu.core_type<tc>, window_params = [{transform_indices = @transform_0, window_bounds = array<i64: 16, 1>}, {transform_indices = @transform_1, window_bounds = array<i64: 16, 1>}, {transform_indices = @transform_2, window_bounds = array<i64: 16, 128>}, {transform_indices = @transform_3, window_bounds = array<i64: 16, 128>}]} {
    %c0 = arith.constant 0 : index
    %c0_0 = arith.constant 0 : index
    %0 = vector.load %arg3[%c0, %c0_0] : memref<16x128xf32, #tpu.memory_space<vmem>>, vector<16x128xf32>
    %c0_1 = arith.constant 0 : index
    %c0_2 = arith.constant 0 : index
    %1 = vector.load %arg1[%c0_1, %c0_2] : memref<16x1xf32, #tpu.memory_space<vmem>>, vector<16x1xf32>
    %2 = vector.broadcast %1 : vector<16x1xf32> to vector<16x128xf32>
    %3 = arith.mulf %0, %2 : vector<16x128xf32>
    %c0_3 = arith.constant 0 : index
    %c0_4 = arith.constant 0 : index
    %4 = vector.load %arg2[%c0_3, %c0_4] : memref<16x1xf32, #tpu.memory_space<vmem>>, vector<16x1xf32>
    %5 = vector.broadcast %4 : vector<16x1xf32> to vector<16x128xf32>
    %6 = arith.addf %3, %5 : vector<16x128xf32>
    %c0_5 = arith.constant 0 : index
    %c0_6 = arith.constant 0 : index
    %7 = vector.load %arg4[%c0_5, %c0_6] : memref<16x128xf32, #tpu.memory_space<vmem>>, vector<16x128xf32>
    tpu.vector_store %arg4[%c0_5, %c0_6], %6 {strides = array<i32>} : memref<16x128xf32, #tpu.memory_space<vmem>>, vector<16x128xf32>,
    return
  }
  func.func @transform_0(%arg0: i32) -> (i32, i32) {
    %c0_i32 = arith.constant 0 : i32
    %c0_i32_0 = arith.constant 0 : i32
    return %arg0, %c0_i32 : i32, i32
  }
  func.func @transform_1(%arg0: i32) -> (i32, i32) {
    %c0_i32 = arith.constant 0 : i32
    %c0_i32_0 = arith.constant 0 : i32
    return %arg0, %c0_i32 : i32, i32
  }
  func.func @transform_2(%arg0: i32) -> (i32, i32) {
    %c0_i32 = arith.constant 0 : i32
    %c0_i32_0 = arith.constant 0 : i32
    return %arg0, %c0_i32 : i32, i32
  }
  func.func @transform_3(%arg0: i32) -> (i32, i32) {
    %c0_i32 = arith.constant 0 : i32
    %c0_i32_0 = arith.constant 0 : i32
    return %arg0, %c0_i32 : i32, i32
  }
}

</mosaic_0001>

<llo_original>
// kernel: tpu_custom_call.1
$region0: #{tpu_custom_call.1}
  #allocation0 [shape = 'u32[]', space=smem, size = 0x4, offset = 0x4, fixed_abs, tag = 'smem constant byte address 0x4 - core index']
  #allocation1 [shape = 'u32[72,128]{1,0:T(1,128)}', space=vmem, size = 0x9000, scoped, tag = 'internal scratch']
  %s0 = inlined_call_operand.vmem [shape: f32[16,1], index: 0, kind: input, shape index: {}]
  %s1 = inlined_call_operand.vmem [shape: f32[16,1], index: 1, kind: input, shape index: {}]
  %s2 = inlined_call_operand.vmem [shape: f32[16,128], index: 2, kind: input, shape index: {}]
  %s3 = inlined_call_operand.hbm [shape: f32[16,128], index: 3, kind: output, shape index: {}]
  %s4 = sld [smem:[#allocation0]]
  $region22: #{tpu_custom_call.1} parent=0
    _
  %s6 = ssub.s32 1, %s4
  %s7 = scalar_select 0, %s6, %s4
  $region1: #{tpu_custom_call.1} parent=0
    #allocation2 [shape = 'u8[8192]{0}', space=vmem, size = 0x2000, scoped, tag = 'output window, operand 0, single buffered']
    #allocation3 [shape = 's32[1]{0}', space=sflag, size = 0x4, scoped, tag = 'scoped memory for tpu_custom_call.1']
    %8 = vsyncpa [#allocation3], 0
    // Predicated region
    $region2: #{tpu_custom_call.1} parent=1 // pred_check
      _
    $region3: #{tpu_custom_call.1} parent=1 // pred_check_branch
      %10 = sbr.rel (0) target = $region5
    $region4: #{tpu_custom_call.1} parent=1 // pred_region
      _
    $region5: #{tpu_custom_call.1} parent=1 // pred_fallthru
      _
    // Predicated region
    $region6: #{tpu_custom_call.1} parent=1 // pred_check
      _
    $region7: #{tpu_custom_call.1} parent=1 // pred_check_branch
      %12 = sbr.rel (0) target = $region9
    $region8: #{tpu_custom_call.1} parent=1 // pred_region
      _
    $region9: #{tpu_custom_call.1} parent=1 // pred_fallthru
      _
    // Predicated region
    $region10: #{tpu_custom_call.1} parent=1 // pred_check
      _
    $region11: #{tpu_custom_call.1} parent=1 // pred_check_branch
      %14 = sbr.rel (0) target = $region13
    $region12: #{tpu_custom_call.1} parent=1 // pred_region
      _
    $region13: #{tpu_custom_call.1} parent=1 // pred_fallthru
      _
    %v15 = vld [vmem:[%s2] sm:$0xff]
    %v16 = vld [vmem:[%s2 + $0x8] sm:$0xff]
    %v17 = vld [vmem:[%s0] sm:$0xff]
    %v18 = vld [vmem:[%s0 + $0x8] sm:$0xff]
    %20 = vset.pattern.permute.xlu0 0
    %21 = vperm.xlu0 %20, %v17
    %v22 = vpop.permute.xlu0 %21
    %25 = vset.pattern.permute.xlu0 0
    %26 = vperm.xlu0 %25, %v18
    %v27 = vpop.permute.xlu0 %26
    %v29 = vmul.f32 %v15, %v22
    %v30 = vmul.f32 %v16, %v27
    %v31 = vld [vmem:[%s1] sm:$0xff]
    %v32 = vld [vmem:[%s1 + $0x8] sm:$0xff]
    %34 = vset.pattern.permute.xlu0 0
    %35 = vperm.xlu0 %34, %v31
    %v36 = vpop.permute.xlu0 %35
    %39 = vset.pattern.permute.xlu0 0
    %40 = vperm.xlu0 %39, %v32
    %v41 = vpop.permute.xlu0 %40
    %v43 = vadd.f32 %v29, %v36
    %v44 = vadd.f32 %v30, %v41
    %45 = vst [vmem:[#allocation2] sm:$0xff] %v43
    %46 = vst [vmem:[#allocation2 + $0x8] sm:$0xff] %v44
    // Predicated region
    $region14: #{tpu_custom_call.1} parent=1 // pred_check
      _
    $region15: #{tpu_custom_call.1} parent=1 // pred_check_branch
      %48 = sbr.rel (0) target = $region17
    $region16: #{tpu_custom_call.1} parent=1 // pred_region
      %50 = vsyncadd [#allocation3], 0
      %s51 = sshll.u32 [#allocation2], 4
      %s52 = int_to_ptr.vmem [resolvable:$true] %s51
      %s53 = sshll.u32 %s3, 4
      %s54 = int_to_ptr.hbm [resolvable:$true] %s53
      %59 = dma.vmem_to_hbm [thread:$0]  %s52, 256, %s54, [#allocation3], 128, 128, 8
    $region17: #{tpu_custom_call.1} parent=1 // pred_fallthru
      _
    // Predicated region
    $region18: #{tpu_custom_call.1} parent=1 // pred_check
      _
    $region19: #{tpu_custom_call.1} parent=1 // pred_check_branch
      %61 = sbr.rel (0) target = $region21
    $region20: #{tpu_custom_call.1} parent=1 // pred_region
      %63 = dma.done [#allocation3], 256
    $region21: #{tpu_custom_call.1} parent=1 // pred_fallthru
      _
    %64 = vsyncpa [#allocation3], 1

</llo_original>
